<compile_context>
chip_gen: v7x
topology: tpu7x:2x2x1
jax: 0.10.0
libtpu: 0.0.40
codegen_flags: <defaults>
</compile_context>

<pallas_src>
import jax
import jax.numpy as jnp
from jax.experimental import pallas as pl
from jax.experimental.pallas import tpu as pltpu

NEG_SLOPE = 0.01   # PyTorch LeakyReLU default
LANE = 128         # TPU lane width: pad feature dims to multiples of this


def _leaky(x):
    return jnp.where(x > 0, x, NEG_SLOPE * x)


def _round_up(n, m):
    return ((n + m - 1) // m) * m


# ---------------------------------------------------------------------------
# Fused kernel: embedding (one-hot matmul) -> branch MLP -> mean pool
# (pooling matmul) for both branches, elementwise fuse, 3-layer head with the
# final Linear(E,1) as a VPU reduce, stable sigmoid.  Everything stays in VMEM.
# ---------------------------------------------------------------------------
def bimlp_kernel(ptok_ref, etok_ref, emb_ref,
                 wp_ref, bp_ref, we_ref, be_ref,
                 w1_ref, b1_ref, w2_ref, b2_ref, w3_ref, b3_ref,
                 o_ref):
    B = o_ref.shape[0]
    V = emb_ref.shape[0]
    emb = emb_ref[...]                                   # [V, EP], loaded once

    def branch(tok_ref, w, b):
        BL = tok_ref.shape[0]
        L = BL // B
        tok = tok_ref[...]                               # [BL, 1] int32
        # one-hot @ embedding  ==  embedding[tok]  (gather done on the MXU)
        vocab_iota = jax.lax.broadcasted_iota(jnp.int32, (BL, V), 1)
        onehot = jnp.where(tok == vocab_iota,
                           jnp.float32(1.0), jnp.float32(0.0))          # [BL, V]
        x = jnp.dot(onehot, emb, preferred_element_type=jnp.float32)    # [BL, EP]
        y = _leaky(jnp.dot(x, w, preferred_element_type=jnp.float32) + b)
        # mean over the sequence axis as a pooling matmul (no reshape copy)
        r = jax.lax.broadcasted_iota(jnp.int32, (B, BL), 0)
        c = jax.lax.broadcasted_iota(jnp.int32, (B, BL), 1)
        lo = r * L
        pool = jnp.where((c >= lo) & (c < lo + L),
                         jnp.float32(1.0 / L), jnp.float32(0.0))        # [B, BL]
        return jnp.dot(pool, y, preferred_element_type=jnp.float32)     # [B, EP]

    para_feat = branch(ptok_ref, wp_ref[...], bp_ref[...])
    epi_feat = branch(etok_ref, we_ref[...], be_ref[...])

    x = para_feat * epi_feat                                            # [B, EP]
    h = _leaky(jnp.dot(x, w1_ref[...],
                       preferred_element_type=jnp.float32) + b1_ref[...])  # [B, HP]
    h = _leaky(jnp.dot(h, w2_ref[...],
                       preferred_element_type=jnp.float32) + b2_ref[...])  # [B, EP]
    # Linear(E, 1): VPU multiply + lane (XLU) reduction — no N=1 MXU matmul.
    z = jnp.sum(h * w3_ref[...], axis=-1, keepdims=True) + b3_ref[...]  # [B, 1]
    # Numerically-stable sigmoid: one EUP exp, no inf intermediate.
    ez = jnp.exp(-jnp.abs(z))
    inv = 1.0 / (1.0 + ez)
    o_ref[...] = jnp.where(z >= 0, inv, ez * inv)


def _bimlp_forward_impl(pp, para_tokens, epi_tokens):
    B, LP = para_tokens.shape
    _, LE = epi_tokens.shape
    ptok = para_tokens.reshape(B * LP, 1).astype(jnp.int32)
    etok = epi_tokens.reshape(B * LE, 1).astype(jnp.int32)

    vmem = pl.BlockSpec(memory_space=pltpu.MemorySpace.VMEM)
    return pl.pallas_call(
        bimlp_kernel,
        out_shape=jax.ShapeDtypeStruct((B, 1), jnp.float32),
        in_specs=[vmem] * 13,
        out_specs=vmem,
    )(ptok, etok, pp["embedding"],
      pp["wp"], pp["bp"], pp["we"], pp["be"],
      pp["w1"], pp["b1"], pp["w2"], pp["b2"], pp["w3_row"], pp["b3"])


bimlp_forward = jax.jit(_bimlp_forward_impl)


# ---------------------------------------------------------------------------
# Parameters: built deterministically (unpadded), then zero-padded once to the
# 128-lane width.  Zero rows/cols leave the math unchanged (LeakyReLU(0)=0,
# 0*0=0, padded w3 lanes are 0), so the padded kernel is exact.
# ---------------------------------------------------------------------------
def init_params(key, vocab_size, embed_size):
    hidden = embed_size * 2
    ks = jax.random.split(key, 10)
    scale = 0.05
    return {
        "embedding": jax.random.normal(ks[0], (vocab_size, embed_size),
                                       jnp.float32) * scale,
        # MLP_para / MLP_epi: Linear(E, E) stored as [in, out]
        "wp": jax.random.normal(ks[1], (embed_size, embed_size), jnp.float32) * scale,
        "bp": jax.random.normal(ks[2], (1, embed_size), jnp.float32) * scale,
        "we": jax.random.normal(ks[3], (embed_size, embed_size), jnp.float32) * scale,
        "be": jax.random.normal(ks[4], (1, embed_size), jnp.float32) * scale,
        # output_layer: Linear(E,2E) -> Linear(2E,E) -> Linear(E,1)
        "w1": jax.random.normal(ks[5], (embed_size, hidden), jnp.float32) * scale,
        "b1": jax.random.normal(ks[6], (1, hidden), jnp.float32) * scale,
        "w2": jax.random.normal(ks[7], (hidden, embed_size), jnp.float32) * scale,
        "b2": jax.random.normal(ks[8], (1, embed_size), jnp.float32) * scale,
        "w3": jax.random.normal(ks[9], (embed_size, 1), jnp.float32) * scale,
        "b3": jnp.zeros((1, 1), jnp.float32),
    }


def pad_params(p):
    """One-time zero-padding of feature dims to 128-lane multiples."""
    E = p["wp"].shape[0]
    H = p["w1"].shape[1]
    V = p["embedding"].shape[0]
    EP = _round_up(E, LANE)
    HP = _round_up(H, LANE)

    def pad2(a, rows, cols):
        return jnp.pad(a, ((0, rows - a.shape[0]), (0, cols - a.shape[1])))

    return {
        "embedding": pad2(p["embedding"], V, EP),
        "wp": pad2(p["wp"], EP, EP), "bp": pad2(p["bp"], 1, EP),
        "we": pad2(p["we"], EP, EP), "be": pad2(p["be"], 1, EP),
        "w1": pad2(p["w1"], EP, HP), "b1": pad2(p["b1"], 1, HP),
        "w2": pad2(p["w2"], HP, EP), "b2": pad2(p["b2"], 1, EP),
        "w3_row": pad2(p["w3"].T, 1, EP),     # stored as a [1, EP] lane row
        "b3": p["b3"],
    }


if __name__ == "__main__":
    # Small deterministic config: vocab=24 (amino-acid-like), embed_size=64,
    # batch=2, seq lengths 8.
    VOCAB, E = 24, 64
    B, LP, LE = 2, 8, 8

    key = jax.random.PRNGKey(0)
    kp, kt1, kt2 = jax.random.split(key, 3)

    params = init_params(kp, VOCAB, E)
    padded = pad_params(params)
    para_tokens = jax.random.randint(kt1, (B, LP), 0, VOCAB, dtype=jnp.int32)
    epi_tokens = jax.random.randint(kt2, (B, LE), 0, VOCAB, dtype=jnp.int32)

    out = bimlp_forward(padded, para_tokens, epi_tokens)
    out = jax.block_until_ready(out)

    # Pure-JAX reference check of the same math (unpadded params).
    def ref(params, pt, et):
        lk = lambda x: jnp.where(x > 0, x, NEG_SLOPE * x)
        pe = params["embedding"][pt]
        ee = params["embedding"][et]
        pf = jnp.mean(lk(pe @ params["wp"] + params["bp"]), axis=1)
        ef = jnp.mean(lk(ee @ params["we"] + params["be"]), axis=1)
        x = pf * ef
        x = lk(x @ params["w1"] + params["b1"])
        x = lk(x @ params["w2"] + params["b2"])
        return jax.nn.sigmoid(x @ params["w3"] + params["b3"])

    expected = ref(params, para_tokens, epi_tokens)
    assert out.shape == (B, 1)
    assert jnp.allclose(out, expected, atol=1e-5, rtol=1e-5)

    print("KERNEL_OK")
</pallas_src>

<mosaic_0001>
module attributes {stable_mosaic.version = 11 : i64} {
  func.func @bimlp_kernel(%arg0: memref<16x1xi32, #tpu.memory_space<vmem>>, %arg1: memref<16x1xi32, #tpu.memory_space<vmem>>, %arg2: memref<24x128xf32, #tpu.memory_space<vmem>>, %arg3: memref<128x128xf32, #tpu.memory_space<vmem>>, %arg4: memref<1x128xf32, #tpu.memory_space<vmem>>, %arg5: memref<128x128xf32, #tpu.memory_space<vmem>>, %arg6: memref<1x128xf32, #tpu.memory_space<vmem>>, %arg7: memref<128x128xf32, #tpu.memory_space<vmem>>, %arg8: memref<1x128xf32, #tpu.memory_space<vmem>>, %arg9: memref<128x128xf32, #tpu.memory_space<vmem>>, %arg10: memref<1x128xf32, #tpu.memory_space<vmem>>, %arg11: memref<1x128xf32, #tpu.memory_space<vmem>>, %arg12: memref<1x1xf32, #tpu.memory_space<vmem>>, %arg13: memref<2x1xf32, #tpu.memory_space<vmem>>) attributes {dimension_semantics = [], scalar_prefetch = 0 : i64, scratch_operands = 0 : i64, tpu.core_type = #tpu.core_type<tc>} {
    %c0 = arith.constant 0 : index
    %c0_0 = arith.constant 0 : index
    %0 = vector.load %arg2[%c0, %c0_0] : memref<24x128xf32, #tpu.memory_space<vmem>>, vector<24x128xf32>
    %c0_1 = arith.constant 0 : index
    %c0_2 = arith.constant 0 : index
    %1 = vector.load %arg3[%c0_1, %c0_2] : memref<128x128xf32, #tpu.memory_space<vmem>>, vector<128x128xf32>
    %c0_3 = arith.constant 0 : index
    %c0_4 = arith.constant 0 : index
    %2 = vector.load %arg4[%c0_3, %c0_4] : memref<1x128xf32, #tpu.memory_space<vmem>>, vector<1x128xf32>
    %c0_5 = arith.constant 0 : index
    %c0_6 = arith.constant 0 : index
    %3 = vector.load %arg0[%c0_5, %c0_6] : memref<16x1xi32, #tpu.memory_space<vmem>>, vector<16x1xi32>
    %4 = tpu.iota {dimensions = array<i32: 1>} : vector<16x24xi32>
    %5 = vector.broadcast %3 : vector<16x1xi32> to vector<16x24xi32>
    %6 = arith.cmpi eq, %5, %4 : vector<16x24xi32>
    %cst = arith.constant 1.000000e+00 : f32
    %cst_7 = arith.constant 0.000000e+00 : f32
    %7 = vector.broadcast %cst : f32 to vector<16x24xf32>
    %8 = vector.broadcast %cst_7 : f32 to vector<16x24xf32>
    %9 = arith.select %6, %7, %8 : vector<16x24xi1>, vector<16x24xf32>
    %cst_8 = arith.constant dense<0.000000e+00> : vector<16x128xf32>
    %10 = tpu.matmul %9, %0, %cst_8 {dimension_numbers = #tpu.dot_dimension_numbers<[1], [0], [0], [1], [0, 0, 1, 1], [], []>} : vector<16x24xf32>, vector<24x128xf32>, vector<16x128xf32> -> vector<16x128xf32>
    %cst_9 = arith.constant dense<0.000000e+00> : vector<16x128xf32>
    %11 = tpu.matmul %10, %1, %cst_9 {dimension_numbers = #tpu.dot_dimension_numbers<[1], [0], [0], [1], [0, 0, 1, 1], [], []>} : vector<16x128xf32>, vector<128x128xf32>, vector<16x128xf32> -> vector<16x128xf32>
    %12 = vector.broadcast %2 : vector<1x128xf32> to vector<16x128xf32>
    %13 = arith.addf %11, %12 : vector<16x128xf32>
    %cst_10 = arith.constant 0.000000e+00 : f32
    %14 = vector.broadcast %cst_10 : f32 to vector<16x128xf32>
    %15 = arith.cmpf ogt, %13, %14 : vector<16x128xf32>
    %cst_11 = arith.constant 0.00999999977 : f32
    %16 = vector.broadcast %cst_11 : f32 to vector<16x128xf32>
    %17 = arith.mulf %16, %13 : vector<16x128xf32>
    %18 = arith.select %15, %13, %17 : vector<16x128xi1>, vector<16x128xf32>
    %19 = tpu.iota {dimensions = array<i32: 0>} : vector<2x16xi32>
    %20 = tpu.iota {dimensions = array<i32: 1>} : vector<2x16xi32>
    %c8_i32 = arith.constant 8 : i32
    %21 = vector.broadcast %c8_i32 : i32 to vector<2x16xi32>
    %22 = arith.muli %19, %21 : vector<2x16xi32>
    %23 = arith.cmpi sge, %20, %22 : vector<2x16xi32>
    %c8_i32_12 = arith.constant 8 : i32
    %24 = vector.broadcast %c8_i32_12 : i32 to vector<2x16xi32>
    %25 = arith.addi %22, %24 : vector<2x16xi32>
    %26 = arith.cmpi slt, %20, %25 : vector<2x16xi32>
    %27 = arith.andi %23, %26 : vector<2x16xi1>
    %cst_13 = arith.constant 1.250000e-01 : f32
    %cst_14 = arith.constant 0.000000e+00 : f32
    %28 = vector.broadcast %cst_13 : f32 to vector<2x16xf32>
    %29 = vector.broadcast %cst_14 : f32 to vector<2x16xf32>
    %30 = arith.select %27, %28, %29 : vector<2x16xi1>, vector<2x16xf32>
    %cst_15 = arith.constant dense<0.000000e+00> : vector<2x128xf32>
    %31 = tpu.matmul %30, %18, %cst_15 {dimension_numbers = #tpu.dot_dimension_numbers<[1], [0], [0], [1], [0, 0, 1, 1], [], []>} : vector<2x16xf32>, vector<16x128xf32>, vector<2x128xf32> -> vector<2x128xf32>
    %c0_16 = arith.constant 0 : index
    %c0_17 = arith.constant 0 : index
    %32 = vector.load %arg5[%c0_16, %c0_17] : memref<128x128xf32, #tpu.memory_space<vmem>>, vector<128x128xf32>
    %c0_18 = arith.constant 0 : index
    %c0_19 = arith.constant 0 : index
    %33 = vector.load %arg6[%c0_18, %c0_19] : memref<1x128xf32, #tpu.memory_space<vmem>>, vector<1x128xf32>
    %c0_20 = arith.constant 0 : index
    %c0_21 = arith.constant 0 : index
    %34 = vector.load %arg1[%c0_20, %c0_21] : memref<16x1xi32, #tpu.memory_space<vmem>>, vector<16x1xi32>
    %35 = tpu.iota {dimensions = array<i32: 1>} : vector<16x24xi32>
    %36 = vector.broadcast %34 : vector<16x1xi32> to vector<16x24xi32>
    %37 = arith.cmpi eq, %36, %35 : vector<16x24xi32>
    %cst_22 = arith.constant 1.000000e+00 : f32
    %cst_23 = arith.constant 0.000000e+00 : f32
    %38 = vector.broadcast %cst_22 : f32 to vector<16x24xf32>
    %39 = vector.broadcast %cst_23 : f32 to vector<16x24xf32>
    %40 = arith.select %37, %38, %39 : vector<16x24xi1>, vector<16x24xf32>
    %cst_24 = arith.constant dense<0.000000e+00> : vector<16x128xf32>
    %41 = tpu.matmul %40, %0, %cst_24 {dimension_numbers = #tpu.dot_dimension_numbers<[1], [0], [0], [1], [0, 0, 1, 1], [], []>} : vector<16x24xf32>, vector<24x128xf32>, vector<16x128xf32> -> vector<16x128xf32>
    %cst_25 = arith.constant dense<0.000000e+00> : vector<16x128xf32>
    %42 = tpu.matmul %41, %32, %cst_25 {dimension_numbers = #tpu.dot_dimension_numbers<[1], [0], [0], [1], [0, 0, 1, 1], [], []>} : vector<16x128xf32>, vector<128x128xf32>, vector<16x128xf32> -> vector<16x128xf32>
    %43 = vector.broadcast %33 : vector<1x128xf32> to vector<16x128xf32>
    %44 = arith.addf %42, %43 : vector<16x128xf32>
    %cst_26 = arith.constant 0.000000e+00 : f32
    %45 = vector.broadcast %cst_26 : f32 to vector<16x128xf32>
    %46 = arith.cmpf ogt, %44, %45 : vector<16x128xf32>
    %cst_27 = arith.constant 0.00999999977 : f32
    %47 = vector.broadcast %cst_27 : f32 to vector<16x128xf32>
    %48 = arith.mulf %47, %44 : vector<16x128xf32>
    %49 = arith.select %46, %44, %48 : vector<16x128xi1>, vector<16x128xf32>
    %50 = tpu.iota {dimensions = array<i32: 0>} : vector<2x16xi32>
    %51 = tpu.iota {dimensions = array<i32: 1>} : vector<2x16xi32>
    %c8_i32_28 = arith.constant 8 : i32
    %52 = vector.broadcast %c8_i32_28 : i32 to vector<2x16xi32>
    %53 = arith.muli %50, %52 : vector<2x16xi32>
    %54 = arith.cmpi sge, %51, %53 : vector<2x16xi32>
    %c8_i32_29 = arith.constant 8 : i32
    %55 = vector.broadcast %c8_i32_29 : i32 to vector<2x16xi32>
    %56 = arith.addi %53, %55 : vector<2x16xi32>
    %57 = arith.cmpi slt, %51, %56 : vector<2x16xi32>
    %58 = arith.andi %54, %57 : vector<2x16xi1>
    %cst_30 = arith.constant 1.250000e-01 : f32
    %cst_31 = arith.constant 0.000000e+00 : f32
    %59 = vector.broadcast %cst_30 : f32 to vector<2x16xf32>
    %60 = vector.broadcast %cst_31 : f32 to vector<2x16xf32>
    %61 = arith.select %58, %59, %60 : vector<2x16xi1>, vector<2x16xf32>
    %cst_32 = arith.constant dense<0.000000e+00> : vector<2x128xf32>
    %62 = tpu.matmul %61, %49, %cst_32 {dimension_numbers = #tpu.dot_dimension_numbers<[1], [0], [0], [1], [0, 0, 1, 1], [], []>} : vector<2x16xf32>, vector<16x128xf32>, vector<2x128xf32> -> vector<2x128xf32>
    %63 = arith.mulf %31, %62 : vector<2x128xf32>
    %c0_33 = arith.constant 0 : index
    %c0_34 = arith.constant 0 : index
    %64 = vector.load %arg7[%c0_33, %c0_34] : memref<128x128xf32, #tpu.memory_space<vmem>>, vector<128x128xf32>
    %cst_35 = arith.constant dense<0.000000e+00> : vector<2x128xf32>
    %65 = tpu.matmul %63, %64, %cst_35 {dimension_numbers = #tpu.dot_dimension_numbers<[1], [0], [0], [1], [0, 0, 1, 1], [], []>} : vector<2x128xf32>, vector<128x128xf32>, vector<2x128xf32> -> vector<2x128xf32>
    %c0_36 = arith.constant 0 : index
    %c0_37 = arith.constant 0 : index
    %66 = vector.load %arg8[%c0_36, %c0_37] : memref<1x128xf32, #tpu.memory_space<vmem>>, vector<1x128xf32>
    %67 = vector.broadcast %66 : vector<1x128xf32> to vector<2x128xf32>
    %68 = arith.addf %65, %67 : vector<2x128xf32>
    %cst_38 = arith.constant 0.000000e+00 : f32
    %69 = vector.broadcast %cst_38 : f32 to vector<2x128xf32>
    %70 = arith.cmpf ogt, %68, %69 : vector<2x128xf32>
    %cst_39 = arith.constant 0.00999999977 : f32
    %71 = vector.broadcast %cst_39 : f32 to vector<2x128xf32>
    %72 = arith.mulf %71, %68 : vector<2x128xf32>
    %73 = arith.select %70, %68, %72 : vector<2x128xi1>, vector<2x128xf32>
    %c0_40 = arith.constant 0 : index
    %c0_41 = arith.constant 0 : index
    %74 = vector.load %arg9[%c0_40, %c0_41] : memref<128x128xf32, #tpu.memory_space<vmem>>, vector<128x128xf32>
    %cst_42 = arith.constant dense<0.000000e+00> : vector<2x128xf32>
    %75 = tpu.matmul %73, %74, %cst_42 {dimension_numbers = #tpu.dot_dimension_numbers<[1], [0], [0], [1], [0, 0, 1, 1], [], []>} : vector<2x128xf32>, vector<128x128xf32>, vector<2x128xf32> -> vector<2x128xf32>
    %c0_43 = arith.constant 0 : index
    %c0_44 = arith.constant 0 : index
    %76 = vector.load %arg10[%c0_43, %c0_44] : memref<1x128xf32, #tpu.memory_space<vmem>>, vector<1x128xf32>
    %77 = vector.broadcast %76 : vector<1x128xf32> to vector<2x128xf32>
    %78 = arith.addf %75, %77 : vector<2x128xf32>
    %cst_45 = arith.constant 0.000000e+00 : f32
    %79 = vector.broadcast %cst_45 : f32 to vector<2x128xf32>
    %80 = arith.cmpf ogt, %78, %79 : vector<2x128xf32>
    %cst_46 = arith.constant 0.00999999977 : f32
    %81 = vector.broadcast %cst_46 : f32 to vector<2x128xf32>
    %82 = arith.mulf %81, %78 : vector<2x128xf32>
    %83 = arith.select %80, %78, %82 : vector<2x128xi1>, vector<2x128xf32>
    %c0_47 = arith.constant 0 : index
    %c0_48 = arith.constant 0 : index
    %84 = vector.load %arg11[%c0_47, %c0_48] : memref<1x128xf32, #tpu.memory_space<vmem>>, vector<1x128xf32>
    %85 = vector.broadcast %84 : vector<1x128xf32> to vector<2x128xf32>
    %86 = arith.mulf %83, %85 : vector<2x128xf32>
    %cst_49 = arith.constant dense<0.000000e+00> : vector<2xf32>
    %87 = vector.multi_reduction <add>, %86, %cst_49 [1] : vector<2x128xf32> to vector<2xf32>
    %88 = vector.shape_cast %87 : vector<2xf32> to vector<2x1xf32>
    %c0_50 = arith.constant 0 : index
    %c0_51 = arith.constant 0 : index
    %89 = vector.load %arg12[%c0_50, %c0_51] : memref<1x1xf32, #tpu.memory_space<vmem>>, vector<1x1xf32>
    %90 = vector.broadcast %89 : vector<1x1xf32> to vector<2x1xf32>
    %91 = arith.addf %88, %90 : vector<2x1xf32>
    %92 = math.absf %91 : vector<2x1xf32>
    %cst_52 = arith.constant 0.000000e+00 : f32
    %93 = vector.broadcast %cst_52 : f32 to vector<2x1xf32>
    %94 = arith.subf %93, %92 : vector<2x1xf32>
    %95 = math.exp %94 : vector<2x1xf32>
    %cst_53 = arith.constant 1.000000e+00 : f32
    %96 = vector.broadcast %cst_53 : f32 to vector<2x1xf32>
    %97 = arith.addf %96, %95 : vector<2x1xf32>
    %cst_54 = arith.constant 1.000000e+00 : f32
    %98 = vector.broadcast %cst_54 : f32 to vector<2x1xf32>
    %99 = arith.divf %98, %97 : vector<2x1xf32>
    %cst_55 = arith.constant 0.000000e+00 : f32
    %100 = vector.broadcast %cst_55 : f32 to vector<2x1xf32>
    %101 = arith.cmpf oge, %91, %100 : vector<2x1xf32>
    %102 = arith.mulf %95, %99 : vector<2x1xf32>
    %103 = arith.select %101, %99, %102 : vector<2x1xi1>, vector<2x1xf32>
    %c0_56 = arith.constant 0 : index
    %c0_57 = arith.constant 0 : index
    %104 = vector.load %arg13[%c0_56, %c0_57] : memref<2x1xf32, #tpu.memory_space<vmem>>, vector<2x1xf32>
    tpu.vector_store %arg13[%c0_56, %c0_57], %103 {strides = array<i32>} : memref<2x1xf32, #tpu.memory_space<vmem>>, vector<2x1xf32>,
    return
  }
}

</mosaic_0001>

<llo_original>
// kernel: _bimlp_forward_impl.1
$region0: #{_bimlp_forward_impl.1}
  #allocation0 [shape = 'u32[]', space=smem, size = 0x4, offset = 0x4, fixed_abs, tag = 'smem constant byte address 0x4 - core index']
  #allocation1 [shape = 'u32[144,128]{1,0:T(1,128)}', space=vmem, size = 0x12000, scoped, tag = 'internal scratch']
  #allocation2 [shape = 'f32[1,1]{1,0:T(1,128)S(1)}', space=vmem, size = 0x200, scoped, tag = 'scoped memory for _bimlp_forward_impl.1']
  %s0 = inlined_call_operand.vmem [shape: s32[16,1], index: 0, kind: input, shape index: {}]
  %s1 = inlined_call_operand.vmem [shape: s32[16,1], index: 1, kind: input, shape index: {}]
  %s2 = inlined_call_operand.vmem [shape: f32[24,128], index: 2, kind: input, shape index: {}]
  %s3 = inlined_call_operand.hbm [shape: f32[128,128], index: 3, kind: input, shape index: {}]
  %s4 = inlined_call_operand.vmem [shape: f32[1,128], index: 4, kind: input, shape index: {}]
  %s5 = inlined_call_operand.hbm [shape: f32[128,128], index: 5, kind: input, shape index: {}]
  %s6 = inlined_call_operand.vmem [shape: f32[1,128], index: 6, kind: input, shape index: {}]
  %s7 = inlined_call_operand.hbm [shape: f32[128,128], index: 7, kind: input, shape index: {}]
  %s8 = inlined_call_operand.vmem [shape: f32[1,128], index: 8, kind: input, shape index: {}]
  %s9 = inlined_call_operand.hbm [shape: f32[128,128], index: 9, kind: input, shape index: {}]
  %s10 = inlined_call_operand.vmem [shape: f32[1,128], index: 10, kind: input, shape index: {}]
  %s11 = inlined_call_operand.vmem [shape: f32[1,128], index: 11, kind: input, shape index: {}]
  %s12 = inlined_call_operand.<no memory space> [shape: f32[1,1], index: 12, kind: input, shape index: {}]
  %s13 = inlined_call_operand.vmem [shape: f32[2,1], index: 13, kind: output, shape index: {}]
  %s14 = sld [smem:[#allocation0]]
  $region78: #{_bimlp_forward_impl.1} parent=0
    _
  %s16 = ssub.s32 1, %s14
  %s17 = scalar_select 0, %s16, %s14
  %v18 = vstv %s12
  %19 = vst [vmem:[#allocation2] sm:$0x1] %v18
  $region1: #{_bimlp_forward_impl.1} parent=0
    #allocation3 [shape = 'u8[65536]{0}', space=vmem, size = 0x10000, scoped, tag = 'input window, operand 3, single buffered']
    #allocation4 [shape = 's32[1]{0}', space=sflag, size = 0x4, scoped, tag = 'scoped memory for _bimlp_forward_impl.1']
    #allocation5 [shape = 'u8[65536]{0}', space=vmem, size = 0x10000, scoped, tag = 'input window, operand 5, single buffered']
    #allocation6 [shape = 's32[1]{0}', space=sflag, size = 0x4, scoped, tag = 'scoped memory for _bimlp_forward_impl.1']
    #allocation7 [shape = 'u8[65536]{0}', space=vmem, size = 0x10000, scoped, tag = 'input window, operand 7, single buffered']
    #allocation8 [shape = 'u8[65536]{0}', space=vmem, size = 0x10000, scoped, tag = 'input window, operand 9, single buffered']
    #allocation9 [shape = 's32[1]{0}', space=sflag, size = 0x4, scoped, tag = 'scoped memory for _bimlp_forward_impl.1']
    %20 = vsyncpa [#allocation4], 0
    %21 = vsyncpa [#allocation6], 0
    %22 = vsyncpa [#allocation9], 0
    // Predicated region
    $region2: #{_bimlp_forward_impl.1} parent=1 // pred_check
      _
    $region3: #{_bimlp_forward_impl.1} parent=1 // pred_check_branch
      %24 = sbr.rel (0) target = $region5
    $region4: #{_bimlp_forward_impl.1} parent=1 // pred_region
      _
    $region5: #{_bimlp_forward_impl.1} parent=1 // pred_fallthru
      _
    // Predicated region
    $region6: #{_bimlp_forward_impl.1} parent=1 // pred_check
      _
    $region7: #{_bimlp_forward_impl.1} parent=1 // pred_check_branch
      %26 = sbr.rel (0) target = $region9
    $region8: #{_bimlp_forward_impl.1} parent=1 // pred_region
      _
    $region9: #{_bimlp_forward_impl.1} parent=1 // pred_fallthru
      _
    // Predicated region
    $region10: #{_bimlp_forward_impl.1} parent=1 // pred_check
      _
    $region11: #{_bimlp_forward_impl.1} parent=1 // pred_check_branch
      %28 = sbr.rel (0) target = $region13
    $region12: #{_bimlp_forward_impl.1} parent=1 // pred_region
      _
    $region13: #{_bimlp_forward_impl.1} parent=1 // pred_fallthru
      _
    // Predicated region
    $region14: #{_bimlp_forward_impl.1} parent=1 // pred_check
      _
    $region15: #{_bimlp_forward_impl.1} parent=1 // pred_check_branch
      %30 = sbr.rel (0) target = $region17
    $region16: #{_bimlp_forward_impl.1} parent=1 // pred_region
      %s32 = ssub.s32 2048, 2048
      %33 = vsyncadd [#allocation4], %s32
      %s34 = sshll.u32 [#allocation3], 4
      %s35 = int_to_ptr.vmem [resolvable:$true] %s34
      %40 = dma.hbm_to_vmem [thread:$0]  %s3, 2048, %s35, [#allocation4], 128, 128, 8
    $region17: #{_bimlp_forward_impl.1} parent=1 // pred_fallthru
      _
    // Predicated region
    $region18: #{_bimlp_forward_impl.1} parent=1 // pred_check
      _
    $region19: #{_bimlp_forward_impl.1} parent=1 // pred_check_branch
      %42 = sbr.rel (0) target = $region21
    $region20: #{_bimlp_forward_impl.1} parent=1 // pred_region
      _
    $region21: #{_bimlp_forward_impl.1} parent=1 // pred_fallthru
      _
    // Predicated region
    $region22: #{_bimlp_forward_impl.1} parent=1 // pred_check
      _
    $region23: #{_bimlp_forward_impl.1} parent=1 // pred_check_branch
      %44 = sbr.rel (0) target = $region25
    $region24: #{_bimlp_forward_impl.1} parent=1 // pred_region
      %s46 = ssub.s32 2048, 2048
      %47 = vsyncadd [#allocation6], %s46
      %s48 = sshll.u32 [#allocation5], 4
      %s49 = int_to_ptr.vmem [resolvable:$true] %s48
      %54 = dma.hbm_to_vmem [thread:$0]  %s5, 2048, %s49, [#allocation6], 128, 128, 8
    $region25: #{_bimlp_forward_impl.1} parent=1 // pred_fallthru
      _
    // Predicated region
    $region26: #{_bimlp_forward_impl.1} parent=1 // pred_check
      _
    $region27: #{_bimlp_forward_impl.1} parent=1 // pred_check_branch
      %56 = sbr.rel (0) target = $region29
    $region28: #{_bimlp_forward_impl.1} parent=1 // pred_region
      _
    $region29: #{_bimlp_forward_impl.1} parent=1 // pred_fallthru
      _
    // Predicated region
    $region30: #{_bimlp_forward_impl.1} parent=1 // pred_check
      _
    $region31: #{_bimlp_forward_impl.1} parent=1 // pred_check_branch
      %58 = sbr.rel (0) target = $region33
    $region32: #{_bimlp_forward_impl.1} parent=1 // pred_region
      %s60 = ssub.s32 2048, 2048
      %61 = vsyncadd [#allocation6], %s60
      %s62 = sshll.u32 [#allocation7], 4
      %s63 = int_to_ptr.vmem [resolvable:$true] %s62
      %68 = dma.hbm_to_vmem [thread:$0]  %s7, 2048, %s63, [#allocation6], 128, 128, 8
    $region33: #{_bimlp_forward_impl.1} parent=1 // pred_fallthru
      _
    // Predicated region
    $region34: #{_bimlp_forward_impl.1} parent=1 // pred_check
      _
    $region35: #{_bimlp_forward_impl.1} parent=1 // pred_check_branch
      %70 = sbr.rel (0) target = $region37
    $region36: #{_bimlp_forward_impl.1} parent=1 // pred_region
      _
    $region37: #{_bimlp_forward_impl.1} parent=1 // pred_fallthru
      _
    // Predicated region
    $region38: #{_bimlp_forward_impl.1} parent=1 // pred_check
      _
    $region39: #{_bimlp_forward_impl.1} parent=1 // pred_check_branch
      %72 = sbr.rel (0) target = $region41
    $region40: #{_bimlp_forward_impl.1} parent=1 // pred_region
      %s74 = ssub.s32 2048, 2048
      %75 = vsyncadd [#allocation9], %s74
      %s76 = sshll.u32 [#allocation8], 4
      %s77 = int_to_ptr.vmem [resolvable:$true] %s76
      %82 = dma.hbm_to_vmem [thread:$0]  %s9, 2048, %s77, [#allocation9], 128, 128, 8
    $region41: #{_bimlp_forward_impl.1} parent=1 // pred_fallthru
      _
    // Predicated region
    $region42: #{_bimlp_forward_impl.1} parent=1 // pred_check
      _
    $region43: #{_bimlp_forward_impl.1} parent=1 // pred_check_branch
      %84 = sbr.rel (0) target = $region45
    $region44: #{_bimlp_forward_impl.1} parent=1 // pred_region
      _
    $region45: #{_bimlp_forward_impl.1} parent=1 // pred_fallthru
      _
    // Predicated region
    $region46: #{_bimlp_forward_impl.1} parent=1 // pred_check
      _
    $region47: #{_bimlp_forward_impl.1} parent=1 // pred_check_branch
      %86 = sbr.rel (0) target = $region49
    $region48: #{_bimlp_forward_impl.1} parent=1 // pred_region
      _
    $region49: #{_bimlp_forward_impl.1} parent=1 // pred_fallthru
      _
    // Predicated region
    $region50: #{_bimlp_forward_impl.1} parent=1 // pred_check
      _
    $region51: #{_bimlp_forward_impl.1} parent=1 // pred_check_branch
      %88 = sbr.rel (0) target = $region53
    $region52: #{_bimlp_forward_impl.1} parent=1 // pred_region
      _
    $region53: #{_bimlp_forward_impl.1} parent=1 // pred_fallthru
      _
    // Predicated region
    $region54: #{_bimlp_forward_impl.1} parent=1 // pred_check
      _
    $region55: #{_bimlp_forward_impl.1} parent=1 // pred_check_branch
      %90 = sbr.rel (0) target = $region57
    $region56: #{_bimlp_forward_impl.1} parent=1 // pred_region
      %91 = dma.done [#allocation4], 2048
    $region57: #{_bimlp_forward_impl.1} parent=1 // pred_fallthru
      _
    // Predicated region
    $region58: #{_bimlp_forward_impl.1} parent=1 // pred_check
      _
    $region59: #{_bimlp_forward_impl.1} parent=1 // pred_check_branch
      %93 = sbr.rel (0) target = $region61
    $region60: #{_bimlp_forward_impl.1} parent=1 // pred_region
      %94 = dma.done [#allocation6], 2048
    $region61: #{_bimlp_forward_impl.1} parent=1 // pred_fallthru
      _
    // Predicated region
    $region62: #{_bimlp_forward_impl.1} parent=1 // pred_check
      _
    $region63: #{_bimlp_forward_impl.1} parent=1 // pred_check_branch
      %96 = sbr.rel (0) target = $region65
    $region64: #{_bimlp_forward_impl.1} parent=1 // pred_region
      %97 = dma.done [#allocation6], 2048
    $region65: #{_bimlp_forward_impl.1} parent=1 // pred_fallthru
      _
    // Predicated region
    $region66: #{_bimlp_forward_impl.1} parent=1 // pred_check
      _
    $region67: #{_bimlp_forward_impl.1} parent=1 // pred_check_branch
      %99 = sbr.rel (0) target = $region69
    $region68: #{_bimlp_forward_impl.1} parent=1 // pred_region
      %100 = dma.done [#allocation9], 2048
    $region69: #{_bimlp_forward_impl.1} parent=1 // pred_fallthru
      _
    %v101 = vld [vmem:[%s2] sm:$0xff]
    %v102 = vld [vmem:[%s2 + $0x8] sm:$0xff]
    %v103 = vld [vmem:[%s2 + $0x10] sm:$0xff]
    %v104 = vld [vmem:[#allocation3] sm:$0xff]
    %v105 = vld [vmem:[#allocation3 + $0x8] sm:$0xff]
    %v106 = vld [vmem:[#allocation3 + $0x10] sm:$0xff]
    %v107 = vld [vmem:[#allocation3 + $0x18] sm:$0xff]
    %v108 = vld [vmem:[#allocation3 + $0x20] sm:$0xff]
    %v109 = vld [vmem:[#allocation3 + $0x28] sm:$0xff]
    %v110 = vld [vmem:[#allocation3 + $0x30] sm:$0xff]
    %v111 = vld [vmem:[#allocation3 + $0x38] sm:$0xff]
    %v112 = vld [vmem:[#allocation3 + $0x40] sm:$0xff]
    %v113 = vld [vmem:[#allocation3 + $0x48] sm:$0xff]
    %v114 = vld [vmem:[#allocation3 + $0x50] sm:$0xff]
    %v115 = vld [vmem:[#allocation3 + $0x58] sm:$0xff]
    %v116 = vld [vmem:[#allocation3 + $0x60] sm:$0xff]
    %v117 = vld [vmem:[#allocation3 + $0x68] sm:$0xff]
    %v118 = vld [vmem:[#allocation3 + $0x70] sm:$0xff]
    %v119 = vld [vmem:[#allocation3 + $0x78] sm:$0xff]
    %v120 = vld [vmem:[%s4] sm:$0x1]
    %v121 = vld [vmem:[%s0] sm:$0xff]
    %v122 = vld [vmem:[%s0 + $0x8] sm:$0xff]
    %v123 = vlaneseq
    %v124 = vand.u32 %v123, 127
    %125 = vset.pattern.permute.xlu0 0
    %126 = vperm.xlu0 %125, %v121
    %v127 = vpop.permute.xlu0 %126
    %128 = vset.pattern.permute.xlu0 0
    %129 = vperm.xlu0 %128, %v122
    %v130 = vpop.permute.xlu0 %129
    %vm131 = vcmp.eq.s32.totalorder %v127, %v124
    %vm132 = vcmp.eq.s32.totalorder %v130, %v124
    %v133 = vsel %vm131, 1.0, 0.0
    %v134 = vsel %vm132, 1.0, 0.0
    %vm135 = vcmask 195584
    %v137 = vsel %vm135, %v133, 0
    %v140 = vsel %vm135, %v134, 0
    %142 = vmatprep.subr.mxu0 0.0
    %143 = vmatpush1.msra.mxu0 %v101
    %144 = vmatprep.subr.mxu0 0.0
    %145 = vmatpush1.msra.mxu0 %v102
    %146 = vmatprep.subr.mxu0 0.0
    %147 = vmatpush1.msra.mxu0 %v103
    %148 = vmatprep.subr.mxu0 0.0
    %149 = vmatpush1.msra.mxu0 0.0
    %150 = vmatprep.subr.mxu0 0.0
    %151 = vmatpush1.msra.mxu0 0.0
    %152 = vmatprep.subr.mxu0 0.0
    %153 = vmatpush1.msra.mxu0 0.0
    %154 = vmatprep.subr.mxu0 0.0
    %155 = vmatpush1.msra.mxu0 0.0
    %156 = vmatprep.subr.mxu0 0.0
    %157 = vmatpush1.msra.mxu0 0.0
    %158 = vmatprep.subr.mxu0 0.0
    %159 = vmatpush1.msra.mxu0 0.0
    %160 = vmatprep.subr.mxu0 0.0
    %161 = vmatpush1.msra.mxu0 0.0
    %162 = vmatprep.subr.mxu0 0.0
    %163 = vmatpush1.msra.mxu0 0.0
    %164 = vmatprep.subr.mxu0 0.0
    %165 = vmatpush1.msra.mxu0 0.0
    %166 = vmatprep.subr.mxu0 0.0
    %167 = vmatpush1.msra.mxu0 0.0
    %168 = vmatprep.subr.mxu0 0.0
    %169 = vmatpush1.msra.mxu0 0.0
    %170 = vmatprep.subr.mxu0 0.0
    %171 = vmatpush1.msra.mxu0 0.0
    %172 = vmatprep.subr.mxu0 0.0
    %173 = vmatpush1.msra.mxu0 0.0
    %174 = vmatprep.subr.mxu0 0.0
    %175 = vmatpush1.msra.mxu0 0.0
    %176 = vmatprep.subr.mxu0 0.0
    %177 = vmatpush1.msra.mxu0 0.0
    %178 = vmatprep.subr.mxu0 0.0
    %179 = vmatpush1.msra.mxu0 0.0
    %180 = vmatprep.subr.mxu0 0.0
    %181 = vmatpush1.msra.mxu0 0.0
    %182 = vmatprep.subr.mxu0 0.0
    %183 = vmatpush1.msra.mxu0 0.0
    %184 = vmatprep.subr.mxu0 0.0
    %185 = vmatpush1.msra.mxu0 0.0
    %186 = vmatprep.subr.mxu0 0.0
    %187 = vmatpush1.msra.mxu0 0.0
    %188 = vmatprep.subr.mxu0 0.0
    %189 = vmatpush1.msra.mxu0 0.0
    %190 = vmatprep.subr.mxu0 0.0
    %191 = vmatpush1.msra.mxu0 0.0
    %192 = vmatprep.subr.mxu0 0.0
    %193 = vmatpush1.msra.mxu0 0.0
    %194 = vmatprep.subr.mxu0 0.0
    %195 = vmatpush1.msra.mxu0 0.0
    %196 = vmatprep.subr.mxu0 0.0
    %197 = vmatpush1.msra.mxu0 0.0
    %198 = vmatprep.subr.mxu0 0.0
    %199 = vmatpush1.msra.mxu0 0.0
    %200 = vmatprep.subr.mxu0 0.0
    %201 = vmatpush1.msra.mxu0 0.0
    %202 = vmatprep.subr.mxu0 0.0
    %203 = vmatpush1.msra.mxu0 0.0
    %204 = vmatprep.subr.mxu0 0.0
    %205 = vmatpush1.msra.mxu0 0.0
    %206 = vmatprep.mubr.f32.mxu0 0.0
    %207 = vmatmul.mubr.f32.gmra.mrb[0].mxu0 %v137
    %v208 = vpop.f32.mrb[0].mxu0
    %v209 = vadd.f32 0.0, %v208
    %v210 = vpop.f32.mrb[0].mxu0
    %211 = vmatprep.mubr.f32.mxu0 0.0
    %212 = vmatmul.mubr.f32.gmra.mrb[0].mxu0 %v140
    %v213 = vpop.f32.mrb[0].mxu0
    %v214 = vadd.f32 0.0, %v213
    %v215 = vpop.f32.mrb[0].mxu0
    %216 = vdwg.mxu0
    %v218 = vlaneseq
    %v219 = vshrl.u32 %v218, 7
    %v220 = vsub.s32 0, %v219
    %v221 = vrot.slane %v120, %v220
    %223 = vmatprep.subr.mxu0 0.0
    %224 = vmatpush1.msra.mxu0 %v104
    %225 = vmatprep.subr.mxu0 0.0
    %226 = vmatpush1.msra.mxu0 %v105
    %227 = vmatprep.subr.mxu0 0.0
    %228 = vmatpush1.msra.mxu0 %v106
    %229 = vmatprep.subr.mxu0 0.0
    %230 = vmatpush1.msra.mxu0 %v107
    %231 = vmatprep.subr.mxu0 0.0
    %232 = vmatpush1.msra.mxu0 %v108
    %233 = vmatprep.subr.mxu0 0.0
    %234 = vmatpush1.msra.mxu0 %v109
    %235 = vmatprep.subr.mxu0 0.0
    %236 = vmatpush1.msra.mxu0 %v110
    %237 = vmatprep.subr.mxu0 0.0
    %238 = vmatpush1.msra.mxu0 %v111
    %239 = vmatprep.subr.mxu0 0.0
    %240 = vmatpush1.msra.mxu0 %v112
    %241 = vmatprep.subr.mxu0 0.0
    %242 = vmatpush1.msra.mxu0 %v113
    %243 = vmatprep.subr.mxu0 0.0
    %244 = vmatpush1.msra.mxu0 %v114
    %245 = vmatprep.subr.mxu0 0.0
    %246 = vmatpush1.msra.mxu0 %v115
    %247 = vmatprep.subr.mxu0 0.0
    %248 = vmatpush1.msra.mxu0 %v116
    %249 = vmatprep.subr.mxu0 0.0
    %250 = vmatpush1.msra.mxu0 %v117
    %251 = vmatprep.subr.mxu0 0.0
    %252 = vmatpush1.msra.mxu0 %v118
    %253 = vmatprep.subr.mxu0 0.0
    %254 = vmatpush1.msra.mxu0 %v119
    %255 = vmatprep.subr.mxu0 0.0
    %256 = vmatpush1.msra.mxu0 0.0
    %257 = vmatprep.subr.mxu0 0.0
    %258 = vmatpush1.msra.mxu0 0.0
    %259 = vmatprep.subr.mxu0 0.0
    %260 = vmatpush1.msra.mxu0 0.0
    %261 = vmatprep.subr.mxu0 0.0
    %262 = vmatpush1.msra.mxu0 0.0
    %263 = vmatprep.subr.mxu0 0.0
    %264 = vmatpush1.msra.mxu0 0.0
    %265 = vmatprep.subr.mxu0 0.0
    %266 = vmatpush1.msra.mxu0 0.0
    %267 = vmatprep.subr.mxu0 0.0
    %268 = vmatpush1.msra.mxu0 0.0
    %269 = vmatprep.subr.mxu0 0.0
    %270 = vmatpush1.msra.mxu0 0.0
    %271 = vmatprep.subr.mxu0 0.0
    %272 = vmatpush1.msra.mxu0 0.0
    %273 = vmatprep.subr.mxu0 0.0
    %274 = vmatpush1.msra.mxu0 0.0
    %275 = vmatprep.subr.mxu0 0.0
    %276 = vmatpush1.msra.mxu0 0.0
    %277 = vmatprep.subr.mxu0 0.0
    %278 = vmatpush1.msra.mxu0 0.0
    %279 = vmatprep.subr.mxu0 0.0
    %280 = vmatpush1.msra.mxu0 0.0
    %281 = vmatprep.subr.mxu0 0.0
    %282 = vmatpush1.msra.mxu0 0.0
    %283 = vmatprep.subr.mxu0 0.0
    %284 = vmatpush1.msra.mxu0 0.0
    %285 = vmatprep.subr.mxu0 0.0
    %286 = vmatpush1.msra.mxu0 0.0
    %287 = vmatprep.mubr.f32.mxu0 0.0
    %288 = vmatmul.mubr.f32.gmra.mrb[0].mxu0 %v209
    %v289 = vpop.f32.mrb[0].mxu0
    %v290 = vadd.f32 %v221, %v289
    %v291 = vpop.f32.mrb[0].mxu0
    %292 = vmatprep.mubr.f32.mxu0 0.0
    %293 = vmatmul.mubr.f32.gmra.mrb[0].mxu0 %v214
    %v294 = vpop.f32.mrb[0].mxu0
    %v295 = vadd.f32 %v221, %v294
    %v296 = vpop.f32.mrb[0].mxu0
    %297 = vdwg.mxu0
    %vm298 = vcmp.gt.f32.partialorder %v290, 0.0
    %vm299 = vcmp.gt.f32.partialorder %v295, 0.0
    %v300 = vmul.f32 %v290, 0.01
    %v301 = vmul.f32 %v295, 0.01
    %v302 = vsel %vm298, %v290, %v300
    %v303 = vsel %vm299, %v295, %v301
    %v304 = vlaneseq
    %v305 = vshrl.u32 %v304, 7
    %v306 = vmul.u32 %v305, 8
    %vm307 = vcmp.ge.s32.totalorder %v124, %v306
    %v308 = vadd.s32 %v306, 8
    %vm309 = vcmp.lt.s32.totalorder %v124, %v308
    %vm310 = vmand %vm307, %vm309
    %v311 = vsel %vm310, 0.125, 0.0
    %vm312 = vcmask 130048
    %v314 = vsel %vm312, %v311, 0
    %316 = vmatprep.subr.mxu0 0.0
    %317 = vmatpush1.msra.mxu0 %v302
    %318 = vmatprep.subr.mxu0 0.0
    %319 = vmatpush1.msra.mxu0 %v303
    %320 = vmatprep.subr.mxu0 0.0
    %321 = vmatpush1.msra.mxu0 0.0
    %322 = vmatprep.subr.mxu0 0.0
    %323 = vmatpush1.msra.mxu0 0.0
    %324 = vmatprep.subr.mxu0 0.0
    %325 = vmatpush1.msra.mxu0 0.0
    %326 = vmatprep.subr.mxu0 0.0
    %327 = vmatpush1.msra.mxu0 0.0
    %328 = vmatprep.subr.mxu0 0.0
    %329 = vmatpush1.msra.mxu0 0.0
    %330 = vmatprep.subr.mxu0 0.0
    %331 = vmatpush1.msra.mxu0 0.0
    %332 = vmatprep.subr.mxu0 0.0
    %333 = vmatpush1.msra.mxu0 0.0
    %334 = vmatprep.subr.mxu0 0.0
    %335 = vmatpush1.msra.mxu0 0.0
    %336 = vmatprep.subr.mxu0 0.0
    %337 = vmatpush1.msra.mxu0 0.0
    %338 = vmatprep.subr.mxu0 0.0
    %339 = vmatpush1.msra.mxu0 0.0
    %340 = vmatprep.subr.mxu0 0.0
    %341 = vmatpush1.msra.mxu0 0.0
    %342 = vmatprep.subr.mxu0 0.0
    %343 = vmatpush1.msra.mxu0 0.0
    %344 = vmatprep.subr.mxu0 0.0
    %345 = vmatpush1.msra.mxu0 0.0
    %346 = vmatprep.subr.mxu0 0.0
    %347 = vmatpush1.msra.mxu0 0.0
    %348 = vmatprep.subr.mxu0 0.0
    %349 = vmatpush1.msra.mxu0 0.0
    %350 = vmatprep.subr.mxu0 0.0
    %351 = vmatpush1.msra.mxu0 0.0
    %352 = vmatprep.subr.mxu0 0.0
    %353 = vmatpush1.msra.mxu0 0.0
    %354 = vmatprep.subr.mxu0 0.0
    %355 = vmatpush1.msra.mxu0 0.0
    %356 = vmatprep.subr.mxu0 0.0
    %357 = vmatpush1.msra.mxu0 0.0
    %358 = vmatprep.subr.mxu0 0.0
    %359 = vmatpush1.msra.mxu0 0.0
    %360 = vmatprep.subr.mxu0 0.0
    %361 = vmatpush1.msra.mxu0 0.0
    %362 = vmatprep.subr.mxu0 0.0
    %363 = vmatpush1.msra.mxu0 0.0
    %364 = vmatprep.subr.mxu0 0.0
    %365 = vmatpush1.msra.mxu0 0.0
    %366 = vmatprep.subr.mxu0 0.0
    %367 = vmatpush1.msra.mxu0 0.0
    %368 = vmatprep.subr.mxu0 0.0
    %369 = vmatpush1.msra.mxu0 0.0
    %370 = vmatprep.subr.mxu0 0.0
    %371 = vmatpush1.msra.mxu0 0.0
    %372 = vmatprep.subr.mxu0 0.0
    %373 = vmatpush1.msra.mxu0 0.0
    %374 = vmatprep.subr.mxu0 0.0
    %375 = vmatpush1.msra.mxu0 0.0
    %376 = vmatprep.subr.mxu0 0.0
    %377 = vmatpush1.msra.mxu0 0.0
    %378 = vmatprep.subr.mxu0 0.0
    %379 = vmatpush1.msra.mxu0 0.0
    %380 = vmatprep.mubr.f32.mxu0 0.0
    %381 = vmatmul.mubr.f32.gmra.mrb[0].mxu0 %v314
    %v382 = vpop.f32.mrb[0].mxu0
    %v383 = vadd.f32 0.0, %v382
    %v384 = vpop.f32.mrb[0].mxu0
    %385 = vdwg.mxu0
    %v386 = vld [vmem:[#allocation5] sm:$0xff]
    %v387 = vld [vmem:[#allocation5 + $0x8] sm:$0xff]
    %v388 = vld [vmem:[#allocation5 + $0x10] sm:$0xff]
    %v389 = vld [vmem:[#allocation5 + $0x18] sm:$0xff]
    %v390 = vld [vmem:[#allocation5 + $0x20] sm:$0xff]
    %v391 = vld [vmem:[#allocation5 + $0x28] sm:$0xff]
    %v392 = vld [vmem:[#allocation5 + $0x30] sm:$0xff]
    %v393 = vld [vmem:[#allocation5 + $0x38] sm:$0xff]
    %v394 = vld [vmem:[#allocation5 + $0x40] sm:$0xff]
    %v395 = vld [vmem:[#allocation5 + $0x48] sm:$0xff]
    %v396 = vld [vmem:[#allocation5 + $0x50] sm:$0xff]
    %v397 = vld [vmem:[#allocation5 + $0x58] sm:$0xff]
    %v398 = vld [vmem:[#allocation5 + $0x60] sm:$0xff]
    %v399 = vld [vmem:[#allocation5 + $0x68] sm:$0xff]
    %v400 = vld [vmem:[#allocation5 + $0x70] sm:$0xff]
    %v401 = vld [vmem:[#allocation5 + $0x78] sm:$0xff]
    %v402 = vld [vmem:[%s6] sm:$0x1]
    %v403 = vld [vmem:[%s1] sm:$0xff]
    %v404 = vld [vmem:[%s1 + $0x8] sm:$0xff]
    %405 = vset.pattern.permute.xlu0 0
    %406 = vperm.xlu0 %405, %v403
    %v407 = vpop.permute.xlu0 %406
    %408 = vset.pattern.permute.xlu0 0
    %409 = vperm.xlu0 %408, %v404
    %v410 = vpop.permute.xlu0 %409
    %vm411 = vcmp.eq.s32.totalorder %v407, %v124
    %vm412 = vcmp.eq.s32.totalorder %v410, %v124
    %v413 = vsel %vm411, 1.0, 0.0
    %v414 = vsel %vm412, 1.0, 0.0
    %v416 = vsel %vm135, %v413, 0
    %v419 = vsel %vm135, %v414, 0
    %421 = vmatprep.subr.mxu0 0.0
    %422 = vmatpush1.msra.mxu0 %v101
    %423 = vmatprep.subr.mxu0 0.0
    %424 = vmatpush1.msra.mxu0 %v102
    %425 = vmatprep.subr.mxu0 0.0
    %426 = vmatpush1.msra.mxu0 %v103
    %427 = vmatprep.subr.mxu0 0.0
    %428 = vmatpush1.msra.mxu0 0.0
    %429 = vmatprep.subr.mxu0 0.0
    %430 = vmatpush1.msra.mxu0 0.0
    %431 = vmatprep.subr.mxu0 0.0
    %432 = vmatpush1.msra.mxu0 0.0
    %433 = vmatprep.subr.mxu0 0.0
    %434 = vmatpush1.msra.mxu0 0.0
    %435 = vmatprep.subr.mxu0 0.0
    %436 = vmatpush1.msra.mxu0 0.0
    %437 = vmatprep.subr.mxu0 0.0
    %438 = vmatpush1.msra.mxu0 0.0
    %439 = vmatprep.subr.mxu0 0.0
    %440 = vmatpush1.msra.mxu0 0.0
    %441 = vmatprep.subr.mxu0 0.0
    %442 = vmatpush1.msra.mxu0 0.0
    %443 = vmatprep.subr.mxu0 0.0
    %444 = vmatpush1.msra.mxu0 0.0
    %445 = vmatprep.subr.mxu0 0.0
    %446 = vmatpush1.msra.mxu0 0.0
    %447 = vmatprep.subr.mxu0 0.0
    %448 = vmatpush1.msra.mxu0 0.0
    %449 = vmatprep.subr.mxu0 0.0
    %450 = vmatpush1.msra.mxu0 0.0
    %451 = vmatprep.subr.mxu0 0.0
    %452 = vmatpush1.msra.mxu0 0.0
    %453 = vmatprep.subr.mxu0 0.0
    %454 = vmatpush1.msra.mxu0 0.0
    %455 = vmatprep.subr.mxu0 0.0
    %456 = vmatpush1.msra.mxu0 0.0
    %457 = vmatprep.subr.mxu0 0.0
    %458 = vmatpush1.msra.mxu0 0.0
    %459 = vmatprep.subr.mxu0 0.0
    %460 = vmatpush1.msra.mxu0 0.0
    %461 = vmatprep.subr.mxu0 0.0
    %462 = vmatpush1.msra.mxu0 0.0
    %463 = vmatprep.subr.mxu0 0.0
    %464 = vmatpush1.msra.mxu0 0.0
    %465 = vmatprep.subr.mxu0 0.0
    %466 = vmatpush1.msra.mxu0 0.0
    %467 = vmatprep.subr.mxu0 0.0
    %468 = vmatpush1.msra.mxu0 0.0
    %469 = vmatprep.subr.mxu0 0.0
    %470 = vmatpush1.msra.mxu0 0.0
    %471 = vmatprep.subr.mxu0 0.0
    %472 = vmatpush1.msra.mxu0 0.0
    %473 = vmatprep.subr.mxu0 0.0
    %474 = vmatpush1.msra.mxu0 0.0
    %475 = vmatprep.subr.mxu0 0.0
    %476 = vmatpush1.msra.mxu0 0.0
    %477 = vmatprep.subr.mxu0 0.0
    %478 = vmatpush1.msra.mxu0 0.0
    %479 = vmatprep.subr.mxu0 0.0
    %480 = vmatpush1.msra.mxu0 0.0
    %481 = vmatprep.subr.mxu0 0.0
    %482 = vmatpush1.msra.mxu0 0.0
    %483 = vmatprep.subr.mxu0 0.0
    %484 = vmatpush1.msra.mxu0 0.0
    %485 = vmatprep.mubr.f32.mxu0 0.0
    %486 = vmatmul.mubr.f32.gmra.mrb[0].mxu0 %v416
    %v487 = vpop.f32.mrb[0].mxu0
    %v488 = vadd.f32 0.0, %v487
    %v489 = vpop.f32.mrb[0].mxu0
    %490 = vmatprep.mubr.f32.mxu0 0.0
    %491 = vmatmul.mubr.f32.gmra.mrb[0].mxu0 %v419
    %v492 = vpop.f32.mrb[0].mxu0
    %v493 = vadd.f32 0.0, %v492
    %v494 = vpop.f32.mrb[0].mxu0
    %495 = vdwg.mxu0
    %v497 = vlaneseq
    %v498 = vshrl.u32 %v497, 7
    %v499 = vsub.s32 0, %v498
    %v500 = vrot.slane %v402, %v499
    %502 = vmatprep.subr.mxu0 0.0
    %503 = vmatpush1.msra.mxu0 %v386
    %504 = vmatprep.subr.mxu0 0.0
    %505 = vmatpush1.msra.mxu0 %v387
    %506 = vmatprep.subr.mxu0 0.0
    %507 = vmatpush1.msra.mxu0 %v388
    %508 = vmatprep.subr.mxu0 0.0
    %509 = vmatpush1.msra.mxu0 %v389
    %510 = vmatprep.subr.mxu0 0.0
    %511 = vmatpush1.msra.mxu0 %v390
    %512 = vmatprep.subr.mxu0 0.0
    %513 = vmatpush1.msra.mxu0 %v391
    %514 = vmatprep.subr.mxu0 0.0
    %515 = vmatpush1.msra.mxu0 %v392
    %516 = vmatprep.subr.mxu0 0.0
    %517 = vmatpush1.msra.mxu0 %v393
    %518 = vmatprep.subr.mxu0 0.0
    %519 = vmatpush1.msra.mxu0 %v394
    %520 = vmatprep.subr.mxu0 0.0
    %521 = vmatpush1.msra.mxu0 %v395
    %522 = vmatprep.subr.mxu0 0.0
    %523 = vmatpush1.msra.mxu0 %v396
    %524 = vmatprep.subr.mxu0 0.0
    %525 = vmatpush1.msra.mxu0 %v397
    %526 = vmatprep.subr.mxu0 0.0
    %527 = vmatpush1.msra.mxu0 %v398
    %528 = vmatprep.subr.mxu0 0.0
    %529 = vmatpush1.msra.mxu0 %v399
    %530 = vmatprep.subr.mxu0 0.0
    %531 = vmatpush1.msra.mxu0 %v400
    %532 = vmatprep.subr.mxu0 0.0
    %533 = vmatpush1.msra.mxu0 %v401
    %534 = vmatprep.subr.mxu0 0.0
    %535 = vmatpush1.msra.mxu0 0.0
    %536 = vmatprep.subr.mxu0 0.0
    %537 = vmatpush1.msra.mxu0 0.0
    %538 = vmatprep.subr.mxu0 0.0
    %539 = vmatpush1.msra.mxu0 0.0
    %540 = vmatprep.subr.mxu0 0.0
    %541 = vmatpush1.msra.mxu0 0.0
    %542 = vmatprep.subr.mxu0 0.0
    %543 = vmatpush1.msra.mxu0 0.0
    %544 = vmatprep.subr.mxu0 0.0
    %545 = vmatpush1.msra.mxu0 0.0
    %546 = vmatprep.subr.mxu0 0.0
    %547 = vmatpush1.msra.mxu0 0.0
    %548 = vmatprep.subr.mxu0 0.0
    %549 = vmatpush1.msra.mxu0 0.0
    %550 = vmatprep.subr.mxu0 0.0
    %551 = vmatpush1.msra.mxu0 0.0
    %552 = vmatprep.subr.mxu0 0.0
    %553 = vmatpush1.msra.mxu0 0.0
    %554 = vmatprep.subr.mxu0 0.0
    %555 = vmatpush1.msra.mxu0 0.0
    %556 = vmatprep.subr.mxu0 0.0
    %557 = vmatpush1.msra.mxu0 0.0
    %558 = vmatprep.subr.mxu0 0.0
    %559 = vmatpush1.msra.mxu0 0.0
    %560 = vmatprep.subr.mxu0 0.0
    %561 = vmatpush1.msra.mxu0 0.0
    %562 = vmatprep.subr.mxu0 0.0
    %563 = vmatpush1.msra.mxu0 0.0
    %564 = vmatprep.subr.mxu0 0.0
    %565 = vmatpush1.msra.mxu0 0.0
    %566 = vmatprep.mubr.f32.mxu0 0.0
    %567 = vmatmul.mubr.f32.gmra.mrb[0].mxu0 %v488
    %v568 = vpop.f32.mrb[0].mxu0
    %v569 = vadd.f32 %v500, %v568
    %v570 = vpop.f32.mrb[0].mxu0
    %571 = vmatprep.mubr.f32.mxu0 0.0
    %572 = vmatmul.mubr.f32.gmra.mrb[0].mxu0 %v493
    %v573 = vpop.f32.mrb[0].mxu0
    %v574 = vadd.f32 %v500, %v573
    %v575 = vpop.f32.mrb[0].mxu0
    %576 = vdwg.mxu0
    %vm577 = vcmp.gt.f32.partialorder %v569, 0.0
    %vm578 = vcmp.gt.f32.partialorder %v574, 0.0
    %v579 = vmul.f32 %v569, 0.01
    %v580 = vmul.f32 %v574, 0.01
    %v581 = vsel %vm577, %v569, %v579
    %v582 = vsel %vm578, %v574, %v580
    %583 = vmatprep.subr.mxu0 0.0
    %584 = vmatpush1.msra.mxu0 %v581
    %585 = vmatprep.subr.mxu0 0.0
    %586 = vmatpush1.msra.mxu0 %v582
    %587 = vmatprep.subr.mxu0 0.0
    %588 = vmatpush1.msra.mxu0 0.0
    %589 = vmatprep.subr.mxu0 0.0
    %590 = vmatpush1.msra.mxu0 0.0
    %591 = vmatprep.subr.mxu0 0.0
    %592 = vmatpush1.msra.mxu0 0.0
    %593 = vmatprep.subr.mxu0 0.0
    %594 = vmatpush1.msra.mxu0 0.0
    %595 = vmatprep.subr.mxu0 0.0
    %596 = vmatpush1.msra.mxu0 0.0
    %597 = vmatprep.subr.mxu0 0.0
    %598 = vmatpush1.msra.mxu0 0.0
    %599 = vmatprep.subr.mxu0 0.0
    %600 = vmatpush1.msra.mxu0 0.0
    %601 = vmatprep.subr.mxu0 0.0
    %602 = vmatpush1.msra.mxu0 0.0
    %603 = vmatprep.subr.mxu0 0.0
    %604 = vmatpush1.msra.mxu0 0.0
    %605 = vmatprep.subr.mxu0 0.0
    %606 = vmatpush1.msra.mxu0 0.0
    %607 = vmatprep.subr.mxu0 0.0
    %608 = vmatpush1.msra.mxu0 0.0
    %609 = vmatprep.subr.mxu0 0.0
    %610 = vmatpush1.msra.mxu0 0.0
    %611 = vmatprep.subr.mxu0 0.0
    %612 = vmatpush1.msra.mxu0 0.0
    %613 = vmatprep.subr.mxu0 0.0
    %614 = vmatpush1.msra.mxu0 0.0
    %615 = vmatprep.subr.mxu0 0.0
    %616 = vmatpush1.msra.mxu0 0.0
    %617 = vmatprep.subr.mxu0 0.0
    %618 = vmatpush1.msra.mxu0 0.0
    %619 = vmatprep.subr.mxu0 0.0
    %620 = vmatpush1.msra.mxu0 0.0
    %621 = vmatprep.subr.mxu0 0.0
    %622 = vmatpush1.msra.mxu0 0.0
    %623 = vmatprep.subr.mxu0 0.0
    %624 = vmatpush1.msra.mxu0 0.0
    %625 = vmatprep.subr.mxu0 0.0
    %626 = vmatpush1.msra.mxu0 0.0
    %627 = vmatprep.subr.mxu0 0.0
    %628 = vmatpush1.msra.mxu0 0.0
    %629 = vmatprep.subr.mxu0 0.0
    %630 = vmatpush1.msra.mxu0 0.0
    %631 = vmatprep.subr.mxu0 0.0
    %632 = vmatpush1.msra.mxu0 0.0
    %633 = vmatprep.subr.mxu0 0.0
    %634 = vmatpush1.msra.mxu0 0.0
    %635 = vmatprep.subr.mxu0 0.0
    %636 = vmatpush1.msra.mxu0 0.0
    %637 = vmatprep.subr.mxu0 0.0
    %638 = vmatpush1.msra.mxu0 0.0
    %639 = vmatprep.subr.mxu0 0.0
    %640 = vmatpush1.msra.mxu0 0.0
    %641 = vmatprep.subr.mxu0 0.0
    %642 = vmatpush1.msra.mxu0 0.0
    %643 = vmatprep.subr.mxu0 0.0
    %644 = vmatpush1.msra.mxu0 0.0
    %645 = vmatprep.subr.mxu0 0.0
    %646 = vmatpush1.msra.mxu0 0.0
    %647 = vmatprep.mubr.f32.mxu0 0.0
    %648 = vmatmul.mubr.f32.gmra.mrb[0].mxu0 %v314
    %v649 = vpop.f32.mrb[0].mxu0
    %v650 = vadd.f32 0.0, %v649
    %v651 = vpop.f32.mrb[0].mxu0
    %652 = vdwg.mxu0
    %v653 = vmul.f32 %v383, %v650
    %v654 = vld [vmem:[#allocation7] sm:$0xff]
    %v655 = vld [vmem:[#allocation7 + $0x8] sm:$0xff]
    %v656 = vld [vmem:[#allocation7 + $0x10] sm:$0xff]
    %v657 = vld [vmem:[#allocation7 + $0x18] sm:$0xff]
    %v658 = vld [vmem:[#allocation7 + $0x20] sm:$0xff]
    %v659 = vld [vmem:[#allocation7 + $0x28] sm:$0xff]
    %v660 = vld [vmem:[#allocation7 + $0x30] sm:$0xff]
    %v661 = vld [vmem:[#allocation7 + $0x38] sm:$0xff]
    %v662 = vld [vmem:[#allocation7 + $0x40] sm:$0xff]
    %v663 = vld [vmem:[#allocation7 + $0x48] sm:$0xff]
    %v664 = vld [vmem:[#allocation7 + $0x50] sm:$0xff]
    %v665 = vld [vmem:[#allocation7 + $0x58] sm:$0xff]
    %v666 = vld [vmem:[#allocation7 + $0x60] sm:$0xff]
    %v667 = vld [vmem:[#allocation7 + $0x68] sm:$0xff]
    %v668 = vld [vmem:[#allocation7 + $0x70] sm:$0xff]
    %v669 = vld [vmem:[#allocation7 + $0x78] sm:$0xff]
    %v670 = vld [vmem:[%s8] sm:$0x1]
    %v672 = vlaneseq
    %v673 = vshrl.u32 %v672, 7
    %v674 = vsub.s32 0, %v673
    %v675 = vrot.slane %v670, %v674
    %677 = vmatprep.subr.mxu0 0.0
    %678 = vmatpush1.msra.mxu0 %v654
    %679 = vmatprep.subr.mxu0 0.0
    %680 = vmatpush1.msra.mxu0 %v655
    %681 = vmatprep.subr.mxu0 0.0
    %682 = vmatpush1.msra.mxu0 %v656
    %683 = vmatprep.subr.mxu0 0.0
    %684 = vmatpush1.msra.mxu0 %v657
    %685 = vmatprep.subr.mxu0 0.0
    %686 = vmatpush1.msra.mxu0 %v658
    %687 = vmatprep.subr.mxu0 0.0
    %688 = vmatpush1.msra.mxu0 %v659
    %689 = vmatprep.subr.mxu0 0.0
    %690 = vmatpush1.msra.mxu0 %v660
    %691 = vmatprep.subr.mxu0 0.0
    %692 = vmatpush1.msra.mxu0 %v661
    %693 = vmatprep.subr.mxu0 0.0
    %694 = vmatpush1.msra.mxu0 %v662
    %695 = vmatprep.subr.mxu0 0.0
    %696 = vmatpush1.msra.mxu0 %v663
    %697 = vmatprep.subr.mxu0 0.0
    %698 = vmatpush1.msra.mxu0 %v664
    %699 = vmatprep.subr.mxu0 0.0
    %700 = vmatpush1.msra.mxu0 %v665
    %701 = vmatprep.subr.mxu0 0.0
    %702 = vmatpush1.msra.mxu0 %v666
    %703 = vmatprep.subr.mxu0 0.0
    %704 = vmatpush1.msra.mxu0 %v667
    %705 = vmatprep.subr.mxu0 0.0
    %706 = vmatpush1.msra.mxu0 %v668
    %707 = vmatprep.subr.mxu0 0.0
    %708 = vmatpush1.msra.mxu0 %v669
    %709 = vmatprep.subr.mxu0 0.0
    %710 = vmatpush1.msra.mxu0 0.0
    %711 = vmatprep.subr.mxu0 0.0
    %712 = vmatpush1.msra.mxu0 0.0
    %713 = vmatprep.subr.mxu0 0.0
    %714 = vmatpush1.msra.mxu0 0.0
    %715 = vmatprep.subr.mxu0 0.0
    %716 = vmatpush1.msra.mxu0 0.0
    %717 = vmatprep.subr.mxu0 0.0
    %718 = vmatpush1.msra.mxu0 0.0
    %719 = vmatprep.subr.mxu0 0.0
    %720 = vmatpush1.msra.mxu0 0.0
    %721 = vmatprep.subr.mxu0 0.0
    %722 = vmatpush1.msra.mxu0 0.0
    %723 = vmatprep.subr.mxu0 0.0
    %724 = vmatpush1.msra.mxu0 0.0
    %725 = vmatprep.subr.mxu0 0.0
    %726 = vmatpush1.msra.mxu0 0.0
    %727 = vmatprep.subr.mxu0 0.0
    %728 = vmatpush1.msra.mxu0 0.0
    %729 = vmatprep.subr.mxu0 0.0
    %730 = vmatpush1.msra.mxu0 0.0
    %731 = vmatprep.subr.mxu0 0.0
    %732 = vmatpush1.msra.mxu0 0.0
    %733 = vmatprep.subr.mxu0 0.0
    %734 = vmatpush1.msra.mxu0 0.0
    %735 = vmatprep.subr.mxu0 0.0
    %736 = vmatpush1.msra.mxu0 0.0
    %737 = vmatprep.subr.mxu0 0.0
    %738 = vmatpush1.msra.mxu0 0.0
    %739 = vmatprep.subr.mxu0 0.0
    %740 = vmatpush1.msra.mxu0 0.0
    %741 = vmatprep.mubr.f32.mxu0 0.0
    %742 = vmatmul.mubr.f32.gmra.mrb[0].mxu0 %v653
    %v743 = vpop.f32.mrb[0].mxu0
    %v744 = vadd.f32 %v675, %v743
    %v745 = vpop.f32.mrb[0].mxu0
    %746 = vdwg.mxu0
    %vm747 = vcmp.gt.f32.partialorder %v744, 0.0
    %v748 = vmul.f32 %v744, 0.01
    %v749 = vsel %vm747, %v744, %v748
    %v750 = vld [vmem:[#allocation8] sm:$0xff]
    %v751 = vld [vmem:[#allocation8 + $0x8] sm:$0xff]
    %v752 = vld [vmem:[#allocation8 + $0x10] sm:$0xff]
    %v753 = vld [vmem:[#allocation8 + $0x18] sm:$0xff]
    %v754 = vld [vmem:[#allocation8 + $0x20] sm:$0xff]
    %v755 = vld [vmem:[#allocation8 + $0x28] sm:$0xff]
    %v756 = vld [vmem:[#allocation8 + $0x30] sm:$0xff]
    %v757 = vld [vmem:[#allocation8 + $0x38] sm:$0xff]
    %v758 = vld [vmem:[#allocation8 + $0x40] sm:$0xff]
    %v759 = vld [vmem:[#allocation8 + $0x48] sm:$0xff]
    %v760 = vld [vmem:[#allocation8 + $0x50] sm:$0xff]
    %v761 = vld [vmem:[#allocation8 + $0x58] sm:$0xff]
    %v762 = vld [vmem:[#allocation8 + $0x60] sm:$0xff]
    %v763 = vld [vmem:[#allocation8 + $0x68] sm:$0xff]
    %v764 = vld [vmem:[#allocation8 + $0x70] sm:$0xff]
    %v765 = vld [vmem:[#allocation8 + $0x78] sm:$0xff]
    %v766 = vld [vmem:[%s10] sm:$0x1]
    %v768 = vlaneseq
    %v769 = vshrl.u32 %v768, 7
    %v770 = vsub.s32 0, %v769
    %v771 = vrot.slane %v766, %v770
    %773 = vmatprep.subr.mxu0 0.0
    %774 = vmatpush1.msra.mxu0 %v750
    %775 = vmatprep.subr.mxu0 0.0
    %776 = vmatpush1.msra.mxu0 %v751
    %777 = vmatprep.subr.mxu0 0.0
    %778 = vmatpush1.msra.mxu0 %v752
    %779 = vmatprep.subr.mxu0 0.0
    %780 = vmatpush1.msra.mxu0 %v753
    %781 = vmatprep.subr.mxu0 0.0
    %782 = vmatpush1.msra.mxu0 %v754
    %783 = vmatprep.subr.mxu0 0.0
    %784 = vmatpush1.msra.mxu0 %v755
    %785 = vmatprep.subr.mxu0 0.0
    %786 = vmatpush1.msra.mxu0 %v756
    %787 = vmatprep.subr.mxu0 0.0
    %788 = vmatpush1.msra.mxu0 %v757
    %789 = vmatprep.subr.mxu0 0.0
    %790 = vmatpush1.msra.mxu0 %v758
    %791 = vmatprep.subr.mxu0 0.0
    %792 = vmatpush1.msra.mxu0 %v759
    %793 = vmatprep.subr.mxu0 0.0
    %794 = vmatpush1.msra.mxu0 %v760
    %795 = vmatprep.subr.mxu0 0.0
    %796 = vmatpush1.msra.mxu0 %v761
    %797 = vmatprep.subr.mxu0 0.0
    %798 = vmatpush1.msra.mxu0 %v762
    %799 = vmatprep.subr.mxu0 0.0
    %800 = vmatpush1.msra.mxu0 %v763
    %801 = vmatprep.subr.mxu0 0.0
    %802 = vmatpush1.msra.mxu0 %v764
    %803 = vmatprep.subr.mxu0 0.0
    %804 = vmatpush1.msra.mxu0 %v765
    %805 = vmatprep.subr.mxu0 0.0
    %806 = vmatpush1.msra.mxu0 0.0
    %807 = vmatprep.subr.mxu0 0.0
    %808 = vmatpush1.msra.mxu0 0.0
    %809 = vmatprep.subr.mxu0 0.0
    %810 = vmatpush1.msra.mxu0 0.0
    %811 = vmatprep.subr.mxu0 0.0
    %812 = vmatpush1.msra.mxu0 0.0
    %813 = vmatprep.subr.mxu0 0.0
    %814 = vmatpush1.msra.mxu0 0.0
    %815 = vmatprep.subr.mxu0 0.0
    %816 = vmatpush1.msra.mxu0 0.0
    %817 = vmatprep.subr.mxu0 0.0
    %818 = vmatpush1.msra.mxu0 0.0
    %819 = vmatprep.subr.mxu0 0.0
    %820 = vmatpush1.msra.mxu0 0.0
    %821 = vmatprep.subr.mxu0 0.0
    %822 = vmatpush1.msra.mxu0 0.0
    %823 = vmatprep.subr.mxu0 0.0
    %824 = vmatpush1.msra.mxu0 0.0
    %825 = vmatprep.subr.mxu0 0.0
    %826 = vmatpush1.msra.mxu0 0.0
    %827 = vmatprep.subr.mxu0 0.0
    %828 = vmatpush1.msra.mxu0 0.0
    %829 = vmatprep.subr.mxu0 0.0
    %830 = vmatpush1.msra.mxu0 0.0
    %831 = vmatprep.subr.mxu0 0.0
    %832 = vmatpush1.msra.mxu0 0.0
    %833 = vmatprep.subr.mxu0 0.0
    %834 = vmatpush1.msra.mxu0 0.0
    %835 = vmatprep.subr.mxu0 0.0
    %836 = vmatpush1.msra.mxu0 0.0
    %837 = vmatprep.mubr.f32.mxu0 0.0
    %838 = vmatmul.mubr.f32.gmra.mrb[0].mxu0 %v749
    %v839 = vpop.f32.mrb[0].mxu0
    %v840 = vadd.f32 %v771, %v839
    %v841 = vpop.f32.mrb[0].mxu0
    %842 = vdwg.mxu0
    %vm843 = vcmp.gt.f32.partialorder %v840, 0.0
    %v844 = vmul.f32 %v840, 0.01
    %v845 = vsel %vm843, %v840, %v844
    %v846 = vld [vmem:[%s11] sm:$0x1]
    %v848 = vlaneseq
    %v849 = vshrl.u32 %v848, 7
    %v850 = vsub.s32 0, %v849
    %v851 = vrot.slane %v846, %v850
    %v853 = vmul.f32 %v845, %v851
    %vm854 = vcmask 1041408
    %v855 = vsel %vm854, %v853, 0.0
    %856 = vadd.xlane.f32.xlu0 %v855
    %v857 = vpop.xlane.xlu0 %856
    %v858 = vld [vmem:[#allocation2] sm:$0x1]
    %v860 = vlaneseq
    %v861 = vshrl.u32 %v860, 7
    %v862 = vsub.s32 0, %v861
    %v863 = vrot.slane %v858, %v862
    %v865 = vadd.f32 %v857, %v863
    %v866 = vand.u32 2147483647, %v865
    %v867 = vsub.f32 0.0, %v866
    %v868 = vmul.f32 %v867, 1.442695
    %v869 = vpow.pop %v868
    %v870 = vadd.f32 %v869, 1.0
    %v871 = vrcp.pop %v870
    %v872 = vmul.f32 1.0, %v871
    %vm873 = vcmp.ge.f32.partialorder %v865, 0.0
    %v874 = vmul.f32 %v869, %v872
    %v875 = vsel %vm873, %v872, %v874
    %vm876 = vcmask 1024
    %877 = vst.msk [vmem:[%s13] sm:$0x3] %vm876, %v875
    // Predicated region
    $region70: #{_bimlp_forward_impl.1} parent=1 // pred_check
      _
    $region71: #{_bimlp_forward_impl.1} parent=1 // pred_check_branch
      %879 = sbr.rel (0) target = $region73
    $region72: #{_bimlp_forward_impl.1} parent=1 // pred_region
      _
    $region73: #{_bimlp_forward_impl.1} parent=1 // pred_fallthru
      _
    // Predicated region
    $region74: #{_bimlp_forward_impl.1} parent=1 // pred_check
      _
    $region75: #{_bimlp_forward_impl.1} parent=1 // pred_check_branch
      %881 = sbr.rel (0) target = $region77
    $region76: #{_bimlp_forward_impl.1} parent=1 // pred_region
      _
    $region77: #{_bimlp_forward_impl.1} parent=1 // pred_fallthru
      _
    %882 = vsyncpa [#allocation4], 1
    %883 = vsyncpa [#allocation6], 1
    %884 = vsyncpa [#allocation9], 1

</llo_original>
